<compile_context>
chip_gen: v7x
topology: tpu7x:2x2x1
jax: 0.10.0
libtpu: 0.0.40
codegen_flags: <defaults>
</compile_context>

<pallas_src>
import functools

import jax
import jax.numpy as jnp
from jax.experimental import pallas as pl
from jax.experimental.pallas import tpu as pltpu


_PER_REL_BUFFER_BUDGET = 8 * 1024 * 1024   # ~6-8 MiB per relevances VMEM buffer


def _round_up(x, m):
    return ((x + m - 1) // m) * m


def _vmem_capacity_bytes():
    """Physical VMEM of the current TPU generation (conservative fallback)."""
    try:
        info = pltpu.get_tpu_info()
        cap = int(getattr(info, "vmem_capacity_bytes", 0))
        if cap > 0:
            return cap
    except Exception:
        pass
    return 64 * 1024 * 1024   # v7x per-TensorCore VMEM: safe lower bound


def _vmem_limit_bytes(footprint_bytes):
    cap = _vmem_capacity_bytes()
    return int(min(cap, max(32 * 1024 * 1024, footprint_bytes + 4 * 1024 * 1024)))


def _is_pre_v6():
    """True on v5e and older chips (no bf16 VPU -> keep f32 elementwise math)."""
    try:
        kind = jax.devices()[0].device_kind.lower()
    except Exception:
        return True
    return any(tag in kind for tag in ("v2", "v3", "v4", "v5e", "v5 lite", "v5lite"))


def _compute_dtype_for(dtype):
    if dtype == jnp.bfloat16 and not _is_pre_v6():
        return jnp.bfloat16
    return jnp.float32


def _choose_tb(batch, rel_row_bytes, other_row_bytes, fixed_bytes=0):
    """Batch-tile size from padded per-batch-row VMEM footprints.

    Budgets the full double-buffered working set (relevances + concepts +
    output blocks, plus any fixed per-call buffers) against the physical VMEM
    of the current generation (64 MiB/core on v7x, 128 MiB on v5e/v6e).
    """
    cap = _vmem_capacity_bytes()
    total_budget = min(48 * 1024 * 1024, cap // 2)
    row_bytes = rel_row_bytes + other_row_bytes
    avail = max(total_budget - 2 * fixed_bytes, 2 * 8 * row_bytes)
    tb = min(_PER_REL_BUFFER_BUDGET // max(rel_row_bytes, 1),
             avail // (2 * row_bytes))
    tb = max(8, min(2048, (tb // 8) * 8))

    b8 = _round_up(batch, 8)
    tb = min(tb, b8)
    # Keep >= 2 blocks on the (parallel) batch axis so both v7x TensorCores /
    # megacore halves get work.
    if b8 >= 16:
        tb = min(tb, _round_up((b8 + 1) // 2, 8))
    # Prefer a tile that divides the 8-padded batch (avoids a wrapper-side pad
    # copy of the whole relevances array) as long as it costs <= 2x in size.
    for cand in range(tb, 7, -8):
        if b8 % cand == 0:
            if 2 * cand >= tb:
                tb = cand
            break
    return tb


def _choose_tk(num_concepts, num_classes, itemsize):
    """Class-axis tile for the wide-K path (K >= 128)."""
    K = num_classes
    if K % 128 != 0:
        return K                          # full rows: contiguous HBM reads
    min_tk = max(128, 512 // itemsize)    # strided HBM runs stay >= 512 B
    min_block_row = 8 * _round_up(num_concepts, 8) * itemsize
    candidates = [tk for tk in range(K, 0, -128) if K % tk == 0 and tk >= min_tk]
    if not candidates:
        candidates = [K]
    for tk in candidates:                 # largest tile that keeps a minimal
        if min_block_row * tk <= _PER_REL_BUFFER_BUDGET:   # (TB=8) block in budget
            return tk
    return candidates[-1]


# ----------------------------------------------------------------------------
# Flat path: K < 128.  Relevances are streamed as lane-dense (TB, C*K) blocks.
# ----------------------------------------------------------------------------
def _flat_kernel(rel_ref, con_ref, expand_ref, reduce_ref, out_ref, *,
                 compute_dtype, precision):
    rel = rel_ref[...].astype(compute_dtype)        # (TB, C*K), lane-dense
    con = con_ref[...].astype(compute_dtype)        # (TB, C)
    # MXU: expand concepts along classes: con_rep[b, c*K + k] = con[b, c].
    con_rep = jnp.dot(con, expand_ref[...],
                      preferred_element_type=compute_dtype, precision=precision)
    prod = rel * con_rep                            # single dense VPU pass
    # MXU: grouped reduce over concepts: out[b, k] = sum_c prod[b, c*K + k].
    acc = jnp.dot(prod, reduce_ref[...],
                  preferred_element_type=jnp.float32, precision=precision)
    out_ref[...] = acc.astype(out_ref.dtype)


def _sum_agg_flat(concepts, relevances, out_dtype, compute_dtype, precision):
    B, C, K = relevances.shape
    CK = C * K
    isz = jnp.dtype(relevances.dtype).itemsize
    isz_c = jnp.dtype(concepts.dtype).itemsize
    isz_o = jnp.dtype(out_dtype).itemsize
    isz_m = jnp.dtype(compute_dtype).itemsize

    rel_row = _round_up(CK, 128) * isz
    oth_row = _round_up(C, 128) * isz_c + _round_up(K, 128) * isz_o
    sel_bytes = (_round_up(C, 8) * _round_up(CK, 128)
                 + _round_up(CK, 8) * 128) * isz_m
    TB = _choose_tb(B, rel_row, oth_row, fixed_bytes=sel_bytes)

    rel_flat = relevances.reshape(B, CK)    # free: collapses contiguous minor dims
    con2 = jnp.squeeze(concepts, axis=-1)   # (B, C)
    B_pad = _round_up(B, TB)
    if B_pad != B:
        pad = B_pad - B
        rel_flat = jnp.pad(rel_flat, ((0, pad), (0, 0)))
        con2 = jnp.pad(con2, ((0, pad), (0, 0)))

    # Tiny constant 0/1 selectors (same block every step -> DMA'd once):
    #   expand[c, f] = 1 iff f // K == c   ->  (con @ expand)[b, f] = con[b, f//K]
    #   reduce[f, k] = 1 iff f %  K == k   ->  (prod @ reduce)[b, k] = sum_c prod[b, c*K+k]
    f_ids = jnp.arange(CK, dtype=jnp.int32)
    expand_mat = (f_ids[None, :] // K ==
                  jnp.arange(C, dtype=jnp.int32)[:, None]).astype(compute_dtype)
    reduce_mat = (f_ids[:, None] % K ==
                  jnp.arange(K, dtype=jnp.int32)[None, :]).astype(compute_dtype)

    footprint = 2 * (TB * (rel_row + oth_row) + sel_bytes)
    out = pl.pallas_call(
        functools.partial(_flat_kernel, compute_dtype=compute_dtype,
                          precision=precision),
        out_shape=jax.ShapeDtypeStruct((B_pad, K), out_dtype),
        grid_spec=pl.GridSpec(
            grid=(B_pad // TB,),
            in_specs=[
                pl.BlockSpec((TB, CK), lambda i: (i, 0)),
                pl.BlockSpec((TB, C), lambda i: (i, 0)),
                pl.BlockSpec((C, CK), lambda i: (0, 0)),
                pl.BlockSpec((CK, K), lambda i: (0, 0)),
            ],
            out_specs=pl.BlockSpec((TB, K), lambda i: (i, 0)),
        ),
        compiler_params=pltpu.CompilerParams(
            dimension_semantics=("parallel",),
            vmem_limit_bytes=_vmem_limit_bytes(footprint),
        ),
    )(rel_flat, con2, expand_mat, reduce_mat)
    return out[:B] if B_pad != B else out


# ----------------------------------------------------------------------------
# Wide path: K >= 128.  3-D blocks are already lane-dense on the class axis.
# ----------------------------------------------------------------------------
def _wide_kernel(rel_ref, con_ref, out_ref, *, compute_dtype):
    rel = rel_ref[...].astype(compute_dtype)        # (TB, C, TK)
    con = con_ref[...].astype(compute_dtype)        # (TB, C, 1): C on sublanes
    prod = rel * con                                # native lane broadcast (VPU)
    out_ref[...] = jnp.sum(prod, axis=1, dtype=jnp.float32).astype(out_ref.dtype)


def _sum_agg_wide(concepts, relevances, out_dtype, compute_dtype):
    B, C, K = relevances.shape
    isz = jnp.dtype(relevances.dtype).itemsize
    isz_c = jnp.dtype(concepts.dtype).itemsize
    isz_o = jnp.dtype(out_dtype).itemsize

    TK = _choose_tk(C, K, isz)
    c_sub = _round_up(C, 8)
    tk_lane = _round_up(TK, 128)
    rel_row = c_sub * tk_lane * isz
    oth_row = c_sub * 128 * isz_c + tk_lane * isz_o
    TB = _choose_tb(B, rel_row, oth_row)

    rel, con = relevances, concepts
    B_pad = _round_up(B, TB)
    if B_pad != B:
        pad = B_pad - B
        rel = jnp.pad(rel, ((0, pad), (0, 0), (0, 0)))
        con = jnp.pad(con, ((0, pad), (0, 0), (0, 0)))

    footprint = 2 * TB * (rel_row + oth_row)
    out = pl.pallas_call(
        functools.partial(_wide_kernel, compute_dtype=compute_dtype),
        out_shape=jax.ShapeDtypeStruct((B_pad, K), out_dtype),
        grid_spec=pl.GridSpec(
            grid=(B_pad // TB, K // TK),
            in_specs=[
                pl.BlockSpec((TB, C, TK), lambda i, j: (i, 0, j)),
                # Un-squeezed concepts: same block across the inner j axis, so
                # they are not re-DMA'd per class tile and need no relayout.
                pl.BlockSpec((TB, C, 1), lambda i, j: (i, 0, 0)),
            ],
            out_specs=pl.BlockSpec((TB, TK), lambda i, j: (i, j)),
        ),
        compiler_params=pltpu.CompilerParams(
            dimension_semantics=("parallel", "parallel"),
            vmem_limit_bytes=_vmem_limit_bytes(footprint),
        ),
    )(rel, con)
    return out[:B] if B_pad != B else out


# ----------------------------------------------------------------------------
# Public entry point (== SumAggregator.forward).
# ----------------------------------------------------------------------------
def sum_aggregator(concepts, relevances):
    """concepts: (B, C, 1), relevances: (B, C, K) -> (B, K)."""
    if concepts.ndim != 3 or concepts.shape[-1] != 1:
        raise ValueError("concepts must have shape (B, NUM_CONCEPTS, 1)")
    B, C, _ = concepts.shape
    Br, Cr, K = relevances.shape
    if (Br, Cr) != (B, C):
        raise ValueError("concepts / relevances batch or concept dims mismatch")

    out_dtype = jnp.result_type(concepts.dtype, relevances.dtype)
    if B == 0 or C == 0 or K == 0:
        return jnp.zeros((B, K), out_dtype)

    compute_dtype = _compute_dtype_for(out_dtype)
    precision = (jax.lax.Precision.HIGHEST
                 if compute_dtype == jnp.float32 else None)
    if K >= 128:
        return _sum_agg_wide(concepts, relevances, out_dtype, compute_dtype)
    return _sum_agg_flat(concepts, relevances, out_dtype, compute_dtype, precision)


if __name__ == "__main__":
    root = jax.random.PRNGKey(0)

    def reference(concepts, relevances):
        return jnp.einsum(
            "bck,bcd->bk",
            relevances.astype(jnp.float32),
            concepts.astype(jnp.float32),
            precision=jax.lax.Precision.HIGHEST,
        )

    checks = [
        # (batch, num_concepts, num_classes, dtype, atol)
        (16, 8, 4, jnp.float32, 1e-4),    # typical SENN head: flat path, 2 batch blocks
        (5, 6, 3, jnp.float32, 1e-4),     # ragged batch + odd C/K: padding path
        (8, 4, 128, jnp.float32, 1e-4),   # lane-dense wide-K path
        (16, 8, 4, jnp.bfloat16, 2e-1),   # bf16 inputs (bf16 VPU on v6e/v7x)
    ]
    for batch, num_concepts, num_classes, dtype, atol in checks:
        root, kc, kr = jax.random.split(root, 3)
        concepts = jax.random.normal(
            kc, (batch, num_concepts, 1), dtype=jnp.float32).astype(dtype)
        relevances = jax.random.normal(
            kr, (batch, num_concepts, num_classes), dtype=jnp.float32).astype(dtype)
        out = jax.block_until_ready(sum_aggregator(concepts, relevances))
        ref = reference(concepts, relevances)
        assert out.shape == (batch, num_classes), (out.shape, (batch, num_classes))
        err = float(jnp.max(jnp.abs(out.astype(jnp.float32) - ref)))
        assert err <= atol, (batch, num_concepts, num_classes, str(dtype), err)

    print("KERNEL_OK")
</pallas_src>

<mosaic_0001>
module attributes {stable_mosaic.version = 11 : i64} {
  func.func @_flat_kernel(%arg0: i32, %arg1: memref<8x32xf32, #tpu.memory_space<vmem>>, %arg2: memref<8x8xf32, #tpu.memory_space<vmem>>, %arg3: memref<8x32xf32, #tpu.memory_space<vmem>>, %arg4: memref<32x4xf32, #tpu.memory_space<vmem>>, %arg5: memref<8x4xf32, #tpu.memory_space<vmem>>) attributes {dimension_semantics = [#tpu.dimension_semantics<parallel>], iteration_bounds = array<i64: 2>, scalar_prefetch = 0 : i64, scratch_operands = 0 : i64, tpu.core_type = #tpu.core_type<tc>, window_params = [{transform_indices = @transform_0, window_bounds = array<i64: 8, 32>}, {transform_indices = @transform_1, window_bounds = array<i64: 8, 8>}, {pipeline_mode = #tpu.pipeline_mode<synchronous>, transform_indices = @transform_2, window_bounds = array<i64: 8, 32>}, {pipeline_mode = #tpu.pipeline_mode<synchronous>, transform_indices = @transform_3, window_bounds = array<i64: 32, 4>}, {transform_indices = @transform_4, window_bounds = array<i64: 8, 4>}]} {
    %c0 = arith.constant 0 : index
    %c0_0 = arith.constant 0 : index
    %0 = vector.load %arg1[%c0, %c0_0] : memref<8x32xf32, #tpu.memory_space<vmem>>, vector<8x32xf32>
    %c0_1 = arith.constant 0 : index
    %c0_2 = arith.constant 0 : index
    %1 = vector.load %arg2[%c0_1, %c0_2] : memref<8x8xf32, #tpu.memory_space<vmem>>, vector<8x8xf32>
    %c0_3 = arith.constant 0 : index
    %c0_4 = arith.constant 0 : index
    %2 = vector.load %arg3[%c0_3, %c0_4] : memref<8x32xf32, #tpu.memory_space<vmem>>, vector<8x32xf32>
    %cst = arith.constant dense<0.000000e+00> : vector<8x32xf32>
    %3 = tpu.matmul %1, %2, %cst {dimension_numbers = #tpu.dot_dimension_numbers<[1], [0], [0], [1], [0, 0, 1, 1], [], []>, precision = #tpu.contract_precision<fp32>} : vector<8x8xf32>, vector<8x32xf32>, vector<8x32xf32> -> vector<8x32xf32>
    %4 = arith.mulf %0, %3 : vector<8x32xf32>
    %c0_5 = arith.constant 0 : index
    %c0_6 = arith.constant 0 : index
    %5 = vector.load %arg4[%c0_5, %c0_6] : memref<32x4xf32, #tpu.memory_space<vmem>>, vector<32x4xf32>
    %cst_7 = arith.constant dense<0.000000e+00> : vector<8x4xf32>
    %6 = tpu.matmul %4, %5, %cst_7 {dimension_numbers = #tpu.dot_dimension_numbers<[1], [0], [0], [1], [0, 0, 1, 1], [], []>, precision = #tpu.contract_precision<fp32>} : vector<8x32xf32>, vector<32x4xf32>, vector<8x4xf32> -> vector<8x4xf32>
    %c0_8 = arith.constant 0 : index
    %c0_9 = arith.constant 0 : index
    %7 = vector.load %arg5[%c0_8, %c0_9] : memref<8x4xf32, #tpu.memory_space<vmem>>, vector<8x4xf32>
    tpu.vector_store %arg5[%c0_8, %c0_9], %6 {strides = array<i32>} : memref<8x4xf32, #tpu.memory_space<vmem>>, vector<8x4xf32>,
    return
  }
  func.func @transform_0(%arg0: i32) -> (i32, i32) {
    %c0_i32 = arith.constant 0 : i32
    %c0_i32_0 = arith.constant 0 : i32
    return %arg0, %c0_i32 : i32, i32
  }
  func.func @transform_1(%arg0: i32) -> (i32, i32) {
    %c0_i32 = arith.constant 0 : i32
    %c0_i32_0 = arith.constant 0 : i32
    return %arg0, %c0_i32 : i32, i32
  }
  func.func @transform_2(%arg0: i32) -> (i32, i32) {
    %c0_i32 = arith.constant 0 : i32
    %c0_i32_0 = arith.constant 0 : i32
    %c0_i32_1 = arith.constant 0 : i32
    return %c0_i32, %c0_i32_0 : i32, i32
  }
  func.func @transform_3(%arg0: i32) -> (i32, i32) {
    %c0_i32 = arith.constant 0 : i32
    %c0_i32_0 = arith.constant 0 : i32
    %c0_i32_1 = arith.constant 0 : i32
    return %c0_i32, %c0_i32_0 : i32, i32
  }
  func.func @transform_4(%arg0: i32) -> (i32, i32) {
    %c0_i32 = arith.constant 0 : i32
    %c0_i32_0 = arith.constant 0 : i32
    return %arg0, %c0_i32 : i32, i32
  }
}

</mosaic_0001>

<llo_original>
// kernel: tpu_custom_call.1
$region0: #{tpu_custom_call.1}
  #allocation0 [shape = 'u32[]', space=smem, size = 0x4, offset = 0x4, fixed_abs, tag = 'smem constant byte address 0x4 - core index']
  #allocation1 [shape = 'u32[144,128]{1,0:T(1,128)}', space=vmem, size = 0x12000, scoped, tag = 'internal scratch']
  %s0 = inlined_call_operand.vmem [shape: f32[16,32], index: 0, kind: input, shape index: {}]
  %s1 = inlined_call_operand.vmem [shape: f32[16,8], index: 1, kind: input, shape index: {}]
  %s2 = inlined_call_operand.vmem [shape: f32[8,32], index: 2, kind: input, shape index: {}]
  %s3 = inlined_call_operand.vmem [shape: f32[32,4], index: 3, kind: input, shape index: {}]
  %s4 = inlined_call_operand.vmem [shape: f32[16,4], index: 4, kind: output, shape index: {}]
  %s5 = sld [smem:[#allocation0]]
  $region49: #{tpu_custom_call.1} parent=0
    _
  %s7 = ssub.s32 1, %s5
  %s8 = scalar_select 0, %s7, %s5
  loop: start=0, step=1, limit=4
  $region2: #{tpu_custom_call.1} parent=0 // loop_pre_header
    _
  $region3: #{tpu_custom_call.1} parent=0 // loop_header
    %s10 = sphi 0, %s14
    %p11 = scmp.ge.s32.totalorder %s10, 4
    %s20 = sphi 0, %s22
    %s23 = sphi 0, %s20
    %s24 = sphi 0, %s23
    %s40 = sphi 0, %s24
    %s46 = sphi 0, %s48
    %s49 = sphi 0, %s46
    %s50 = sphi 0, %s49
    %s66 = sphi 0, %s50
    %s70 = sphi 0, %s70
    %s72 = sphi 0, %s70
    %s73 = sphi 0, %s72
    %s87 = sphi 0, %s73
    %s91 = sphi 0, %s91
    %s93 = sphi 0, %s91
    %s94 = sphi 0, %s93
    %s108 = sphi 0, %s94
    %s114 = sphi 0, %s116
    %s117 = sphi 0, %s114
    %s118 = sphi 0, %s117
    %s134 = sphi 0, %s118
  $region4: #{tpu_custom_call.1} parent=0 // loop_header_branch
    %13 = sbr.rel (%p11) target = $region8
  $region5: #{tpu_custom_call.1} parent=0 // loop_body
    %s15 = ssub.s32 %s10, 1
    %s16 = ssub.s32 %s10, 2
    %s17 = sadd.s32 %s10, 1
    %s18 = ssub.s32 %s10, %s17
    %p19 = scmp.eq.s32.totalorder %s18, 0
    %s21 = sadd.s32 %s20, 1
    %s22 = scalar_select %p19, %s20, %s21
    %p25 = pneg %p19
    %p26 = scmp.eq.s32.totalorder %s10, 1
    %p27 = por %p25, %p26
    %p28 = scmp.ne.s32.totalorder %s20, %s23
    %p29 = scmp.eq.s32.totalorder %s10, 0
    %p30 = por %p28, %p29
    %p31 = scmp.ne.s32.totalorder %s20, %s23
    %p32 = scmp.eq.s32.totalorder %s15, 1
    %p33 = por %p31, %p32
    %p34 = scmp.ne.s32.totalorder %s23, %s24
    %p35 = scmp.eq.s32.totalorder %s15, 0
    %p36 = por %p34, %p35
    %p37 = scmp.ne.s32.totalorder %s23, %s24
    %p38 = scmp.eq.s32.totalorder %s16, 1
    %p39 = por %p37, %p38
    %p41 = scmp.ne.s32.totalorder %s24, %s40
    %p42 = scmp.eq.s32.totalorder %s16, 0
    %p43 = por %p41, %p42
    %s44 = ssub.s32 %s10, %s17
    %p45 = scmp.eq.s32.totalorder %s44, 0
    %s47 = sadd.s32 %s46, 1
    %s48 = scalar_select %p45, %s46, %s47
    %p51 = pneg %p45
    %p52 = scmp.eq.s32.totalorder %s10, 1
    %p53 = por %p51, %p52
    %p54 = scmp.ne.s32.totalorder %s46, %s49
    %p55 = scmp.eq.s32.totalorder %s10, 0
    %p56 = por %p54, %p55
    %p57 = scmp.ne.s32.totalorder %s46, %s49
    %p58 = scmp.eq.s32.totalorder %s15, 1
    %p59 = por %p57, %p58
    %p60 = scmp.ne.s32.totalorder %s49, %s50
    %p61 = scmp.eq.s32.totalorder %s15, 0
    %p62 = por %p60, %p61
    %p63 = scmp.ne.s32.totalorder %s49, %s50
    %p64 = scmp.eq.s32.totalorder %s16, 1
    %p65 = por %p63, %p64
    %p67 = scmp.ne.s32.totalorder %s50, %s66
    %p68 = scmp.eq.s32.totalorder %s16, 0
    %p69 = por %p67, %p68
    %s71 = sadd.s32 %s70, 1
    %p74 = scmp.eq.s32.totalorder %s10, 1
    %p75 = scmp.ne.s32.totalorder %s70, %s72
    %p76 = scmp.eq.s32.totalorder %s10, 0
    %p77 = por %p75, %p76
    %p78 = scmp.ne.s32.totalorder %s70, %s72
    %p79 = scmp.eq.s32.totalorder %s15, 1
    %p80 = por %p78, %p79
    %p81 = scmp.ne.s32.totalorder %s72, %s73
    %p82 = scmp.eq.s32.totalorder %s15, 0
    %p83 = por %p81, %p82
    %p84 = scmp.ne.s32.totalorder %s72, %s73
    %p85 = scmp.eq.s32.totalorder %s16, 1
    %p86 = por %p84, %p85
    %p88 = scmp.ne.s32.totalorder %s73, %s87
    %p89 = scmp.eq.s32.totalorder %s16, 0
    %p90 = por %p88, %p89
    %s92 = sadd.s32 %s91, 1
    %p95 = scmp.eq.s32.totalorder %s10, 1
    %p96 = scmp.ne.s32.totalorder %s91, %s93
    %p97 = scmp.eq.s32.totalorder %s10, 0
    %p98 = por %p96, %p97
    %p99 = scmp.ne.s32.totalorder %s91, %s93
    %p100 = scmp.eq.s32.totalorder %s15, 1
    %p101 = por %p99, %p100
    %p102 = scmp.ne.s32.totalorder %s93, %s94
    %p103 = scmp.eq.s32.totalorder %s15, 0
    %p104 = por %p102, %p103
    %p105 = scmp.ne.s32.totalorder %s93, %s94
    %p106 = scmp.eq.s32.totalorder %s16, 1
    %p107 = por %p105, %p106
    %p109 = scmp.ne.s32.totalorder %s94, %s108
    %p110 = scmp.eq.s32.totalorder %s16, 0
    %p111 = por %p109, %p110
    %s112 = ssub.s32 %s10, %s17
    %p113 = scmp.eq.s32.totalorder %s112, 0
    %s115 = sadd.s32 %s114, 1
    %s116 = scalar_select %p113, %s114, %s115
    %p119 = pneg %p113
    %p120 = scmp.eq.s32.totalorder %s10, 1
    %p121 = por %p119, %p120
    %p122 = scmp.ne.s32.totalorder %s114, %s117
    %p123 = scmp.eq.s32.totalorder %s10, 0
    %p124 = por %p122, %p123
    %p125 = scmp.ne.s32.totalorder %s114, %s117
    %p126 = scmp.eq.s32.totalorder %s15, 1
    %p127 = por %p125, %p126
    %p128 = scmp.ne.s32.totalorder %s117, %s118
    %p129 = scmp.eq.s32.totalorder %s15, 0
    %p130 = por %p128, %p129
    %p131 = scmp.ne.s32.totalorder %s117, %s118
    %p132 = scmp.eq.s32.totalorder %s16, 1
    %p133 = por %p131, %p132
    %p135 = scmp.ne.s32.totalorder %s118, %s134
    %p136 = scmp.eq.s32.totalorder %s16, 0
    %p137 = por %p135, %p136
    %p138 = scmp.le.s32.totalorder 1, %s10
    %p139 = scmp.lt.s32.totalorder %s10, 3
    %p140 = pnand %p138, %p139
    %p141 = pneg %p140
    // Predicated region
    $region9: #{tpu_custom_call.1} parent=5 // pred_check
      _
    $region10: #{tpu_custom_call.1} parent=5 // pred_check_branch
      %143 = sbr.rel (%p140) target = $region12
    $region11: #{tpu_custom_call.1} parent=5 // pred_region
      %s144 = ssub.s32 %s10, 1
      // Predicated region
      $region13: #{tpu_custom_call.1} parent=11 // pred_check
        %p145 = pneg %p83
      $region14: #{tpu_custom_call.1} parent=11 // pred_check_branch
        %147 = sbr.rel (%p145) target = $region16
      $region15: #{tpu_custom_call.1} parent=11 // pred_region
        _
      $region16: #{tpu_custom_call.1} parent=11 // pred_fallthru
        _
      // Predicated region
      $region17: #{tpu_custom_call.1} parent=11 // pred_check
        %p148 = pneg %p104
      $region18: #{tpu_custom_call.1} parent=11 // pred_check_branch
        %150 = sbr.rel (%p148) target = $region20
      $region19: #{tpu_custom_call.1} parent=11 // pred_region
        _
      $region20: #{tpu_custom_call.1} parent=11 // pred_fallthru
        _
    $region12: #{tpu_custom_call.1} parent=5 // pred_fallthru
      _
    %p151 = scmp.lt.s32.totalorder %s10, 2
    // Predicated region
    $region21: #{tpu_custom_call.1} parent=5 // pred_check
      %p152 = pneg %p151
    $region22: #{tpu_custom_call.1} parent=5 // pred_check_branch
      %154 = sbr.rel (%p152) target = $region24
    $region23: #{tpu_custom_call.1} parent=5 // pred_region
      // Predicated region
      $region25: #{tpu_custom_call.1} parent=23 // pred_check
        %p155 = pneg %p30
      $region26: #{tpu_custom_call.1} parent=23 // pred_check_branch
        %157 = sbr.rel (%p155) target = $region28
      $region27: #{tpu_custom_call.1} parent=23 // pred_region
        %p158 = scmp.lt.s32.totalorder %s10, 1
        %s159 = scalar_select %p158, %s10, 1
        %s160 = smul.addr %s159, 8
        %s161 = scalar_lea.vmem %s0, %s160
      $region28: #{tpu_custom_call.1} parent=23 // pred_fallthru
        _
      // Predicated region
      $region29: #{tpu_custom_call.1} parent=23 // pred_check
        %p162 = pneg %p56
      $region30: #{tpu_custom_call.1} parent=23 // pred_check_branch
        %164 = sbr.rel (%p162) target = $region32
      $region31: #{tpu_custom_call.1} parent=23 // pred_region
        %p165 = scmp.lt.s32.totalorder %s10, 1
        %s166 = scalar_select %p165, %s10, 1
        %s167 = smul.addr %s166, 8
        %s168 = scalar_lea.vmem %s1, %s167
      $region32: #{tpu_custom_call.1} parent=23 // pred_fallthru
        _
    $region24: #{tpu_custom_call.1} parent=5 // pred_fallthru
      _
    %p169 = scmp.le.s32.totalorder 1, %s10
    %p170 = scmp.lt.s32.totalorder %s10, 3
    %p171 = pnand %p169, %p170
    %p172 = pneg %p171
    // Predicated region
    $region33: #{tpu_custom_call.1} parent=5 // pred_check
      _
    $region34: #{tpu_custom_call.1} parent=5 // pred_check_branch
      %174 = sbr.rel (%p171) target = $region36
    $region35: #{tpu_custom_call.1} parent=5 // pred_region
      %s175 = ssub.s32 %s10, 1
      %p176 = scmp.lt.s32.totalorder %s15, 1
      %s177 = scalar_select %p176, %s15, 1
      %s178 = smul.addr %s177, 8
      %s179 = scalar_lea.vmem %s0, %s178
      %p180 = pneg %p36
      %p181 = pneg %p33
      %p182 = scmp.lt.s32.totalorder %s15, 1
      %s183 = scalar_select %p182, %s15, 1
      %s184 = smul.addr %s183, 8
      %s185 = scalar_lea.vmem %s1, %s184
      %p186 = pneg %p62
      %p187 = pneg %p59
      %p188 = pneg %p83
      %p189 = pneg %p80
      %p190 = pneg %p104
      %p191 = pneg %p101
      %p192 = pneg %p130
      %p193 = pneg %p127
      %p194 = scmp.lt.s32.totalorder %s15, 1
      %s195 = scalar_select %p194, %s15, 1
      %s196 = smul.addr %s195, 8
      %s197 = scalar_lea.vmem %s4, %s196
      %p198 = scmp.lt.s32.totalorder %s15, 1
      %s199 = scalar_select %p198, %s15, 1
      %s200 = smul.addr %s199, 8
      %s201 = scalar_lea.vmem %s0, %s200
      %p202 = scmp.lt.s32.totalorder %s15, 1
      %s203 = scalar_select %p202, %s15, 1
      %s204 = smul.addr %s203, 8
      %s205 = scalar_lea.vmem %s1, %s204
      %p206 = scmp.lt.s32.totalorder %s15, 1
      %s207 = scalar_select %p206, %s15, 1
      %s208 = smul.addr %s207, 8
      %s209 = scalar_lea.vmem %s4, %s208
      %v210 = vld [vmem:[%s201] sm:$0xff]
      %v211 = vld [vmem:[%s205] sm:$0xff]
      %v212 = vld [vmem:[%s2] sm:$0xff]
      %vm213 = vcmask 64512
      %v215 = vsel %vm213, %v211, 0
      %217 = vmatprep.subr.mxu0 0.0
      %v218 = vand.u32 %v212, 4294901760
      %219 = vmatpush1.msra.mxu0 %v218
      %220 = vmatprep.subr.mxu0 0.0
      %221 = vmatpush1.msra.mxu0 0.0
      %222 = vmatprep.subr.mxu0 0.0
      %223 = vmatpush1.msra.mxu0 0.0
      %224 = vmatprep.subr.mxu0 0.0
      %225 = vmatpush1.msra.mxu0 0.0
      %226 = vmatprep.subr.mxu0 0.0
      %227 = vmatpush1.msra.mxu0 0.0
      %228 = vmatprep.subr.mxu0 0.0
      %229 = vmatpush1.msra.mxu0 0.0
      %230 = vmatprep.subr.mxu0 0.0
      %231 = vmatpush1.msra.mxu0 0.0
      %232 = vmatprep.subr.mxu0 0.0
      %233 = vmatpush1.msra.mxu0 0.0
      %234 = vmatprep.subr.mxu0 0.0
      %235 = vmatpush1.msra.mxu0 0.0
      %236 = vmatprep.subr.mxu0 0.0
      %237 = vmatpush1.msra.mxu0 0.0
      %238 = vmatprep.subr.mxu0 0.0
      %239 = vmatpush1.msra.mxu0 0.0
      %240 = vmatprep.subr.mxu0 0.0
      %241 = vmatpush1.msra.mxu0 0.0
      %242 = vmatprep.subr.mxu0 0.0
      %243 = vmatpush1.msra.mxu0 0.0
      %244 = vmatprep.subr.mxu0 0.0
      %245 = vmatpush1.msra.mxu0 0.0
      %246 = vmatprep.subr.mxu0 0.0
      %247 = vmatpush1.msra.mxu0 0.0
      %248 = vmatprep.subr.mxu0 0.0
      %249 = vmatpush1.msra.mxu0 0.0
      %250 = vmatprep.subr.mxu0 0.0
      %251 = vmatpush1.msra.mxu0 0.0
      %252 = vmatprep.subr.mxu0 0.0
      %253 = vmatpush1.msra.mxu0 0.0
      %254 = vmatprep.subr.mxu0 0.0
      %255 = vmatpush1.msra.mxu0 0.0
      %256 = vmatprep.subr.mxu0 0.0
      %257 = vmatpush1.msra.mxu0 0.0
      %258 = vmatprep.subr.mxu0 0.0
      %259 = vmatpush1.msra.mxu0 0.0
      %260 = vmatprep.subr.mxu0 0.0
      %261 = vmatpush1.msra.mxu0 0.0
      %262 = vmatprep.subr.mxu0 0.0
      %263 = vmatpush1.msra.mxu0 0.0
      %264 = vmatprep.subr.mxu0 0.0
      %265 = vmatpush1.msra.mxu0 0.0
      %266 = vmatprep.subr.mxu0 0.0
      %267 = vmatpush1.msra.mxu0 0.0
      %268 = vmatprep.subr.mxu0 0.0
      %269 = vmatpush1.msra.mxu0 0.0
      %270 = vmatprep.subr.mxu0 0.0
      %271 = vmatpush1.msra.mxu0 0.0
      %272 = vmatprep.subr.mxu0 0.0
      %273 = vmatpush1.msra.mxu0 0.0
      %274 = vmatprep.subr.mxu0 0.0
      %275 = vmatpush1.msra.mxu0 0.0
      %276 = vmatprep.subr.mxu0 0.0
      %277 = vmatpush1.msra.mxu0 0.0
      %278 = vmatprep.subr.mxu0 0.0
      %279 = vmatpush1.msra.mxu0 0.0
      %280 = vmatprep.subr.mxu0 0.0
      %281 = vmatpush1.msra.mxu0 0.0
      %282 = vmatprep.mubr.f32.mxu0 0.0
      %v283 = vand.u32 %v215, 4294901760
      %v284 = vsub.f32 %v215, %v283
      %v285 = vand.u32 %v284, 4294901760
      %v286 = vsub.f32 %v284, %v285
      %v287 = vand.u32 %v286, 4294901760
      %288 = vmatmul.mubr.f32.gmra.mrb[0].mxu0 %v287
      %v289 = vpop.f32.mrb[0].mxu0
      %v290 = vadd.f32 0.0, %v289
      %v291 = vpop.f32.mrb[0].mxu0
      %292 = vdwg.mxu0
      %293 = vmatprep.subr.mxu0 0.0
      %v294 = vand.u32 %v212, 4294901760
      %v295 = vsub.f32 %v212, %v294
      %v296 = vand.u32 %v295, 4294901760
      %v297 = vsub.f32 %v295, %v296
      %v298 = vand.u32 %v297, 4294901760
      %299 = vmatpush1.msra.mxu0 %v298
      %300 = vmatprep.subr.mxu0 0.0
      %301 = vmatpush1.msra.mxu0 0.0
      %302 = vmatprep.subr.mxu0 0.0
      %303 = vmatpush1.msra.mxu0 0.0
      %304 = vmatprep.subr.mxu0 0.0
      %305 = vmatpush1.msra.mxu0 0.0
      %306 = vmatprep.subr.mxu0 0.0
      %307 = vmatpush1.msra.mxu0 0.0
      %308 = vmatprep.subr.mxu0 0.0
      %309 = vmatpush1.msra.mxu0 0.0
      %310 = vmatprep.subr.mxu0 0.0
      %311 = vmatpush1.msra.mxu0 0.0
      %312 = vmatprep.subr.mxu0 0.0
      %313 = vmatpush1.msra.mxu0 0.0
      %314 = vmatprep.subr.mxu0 0.0
      %315 = vmatpush1.msra.mxu0 0.0
      %316 = vmatprep.subr.mxu0 0.0
      %317 = vmatpush1.msra.mxu0 0.0
      %318 = vmatprep.subr.mxu0 0.0
      %319 = vmatpush1.msra.mxu0 0.0
      %320 = vmatprep.subr.mxu0 0.0
      %321 = vmatpush1.msra.mxu0 0.0
      %322 = vmatprep.subr.mxu0 0.0
      %323 = vmatpush1.msra.mxu0 0.0
      %324 = vmatprep.subr.mxu0 0.0
      %325 = vmatpush1.msra.mxu0 0.0
      %326 = vmatprep.subr.mxu0 0.0
      %327 = vmatpush1.msra.mxu0 0.0
      %328 = vmatprep.subr.mxu0 0.0
      %329 = vmatpush1.msra.mxu0 0.0
      %330 = vmatprep.subr.mxu0 0.0
      %331 = vmatpush1.msra.mxu0 0.0
      %332 = vmatprep.subr.mxu0 0.0
      %333 = vmatpush1.msra.mxu0 0.0
      %334 = vmatprep.subr.mxu0 0.0
      %335 = vmatpush1.msra.mxu0 0.0
      %336 = vmatprep.subr.mxu0 0.0
      %337 = vmatpush1.msra.mxu0 0.0
      %338 = vmatprep.subr.mxu0 0.0
      %339 = vmatpush1.msra.mxu0 0.0
      %340 = vmatprep.subr.mxu0 0.0
      %341 = vmatpush1.msra.mxu0 0.0
      %342 = vmatprep.subr.mxu0 0.0
      %343 = vmatpush1.msra.mxu0 0.0
      %344 = vmatprep.subr.mxu0 0.0
      %345 = vmatpush1.msra.mxu0 0.0
      %346 = vmatprep.subr.mxu0 0.0
      %347 = vmatpush1.msra.mxu0 0.0
      %348 = vmatprep.subr.mxu0 0.0
      %349 = vmatpush1.msra.mxu0 0.0
      %350 = vmatprep.subr.mxu0 0.0
      %351 = vmatpush1.msra.mxu0 0.0
      %352 = vmatprep.subr.mxu0 0.0
      %353 = vmatpush1.msra.mxu0 0.0
      %354 = vmatprep.subr.mxu0 0.0
      %355 = vmatpush1.msra.mxu0 0.0
      %356 = vmatprep.subr.mxu0 0.0
      %357 = vmatpush1.msra.mxu0 0.0
      %358 = vmatprep.subr.mxu0 0.0
      %359 = vmatpush1.msra.mxu0 0.0
      %360 = vmatprep.subr.mxu0 0.0
      %361 = vmatpush1.msra.mxu0 0.0
      %362 = vmatprep.mubr.f32.mxu0 0.0
      %v363 = vand.u32 %v215, 4294901760
      %364 = vmatmul.mubr.f32.gmra.mrb[0].mxu0 %v363
      %v365 = vpop.f32.mrb[0].mxu0
      %v366 = vadd.f32 %v290, %v365
      %v367 = vpop.f32.mrb[0].mxu0
      %368 = vdwg.mxu0
      %369 = vmatprep.subr.mxu0 0.0
      %v370 = vand.u32 %v212, 4294901760
      %v371 = vsub.f32 %v212, %v370
      %372 = vmatpush1.msra.mxu0 %v371
      %373 = vmatprep.subr.mxu0 0.0
      %374 = vmatpush1.msra.mxu0 0.0
      %375 = vmatprep.subr.mxu0 0.0
      %376 = vmatpush1.msra.mxu0 0.0
      %377 = vmatprep.subr.mxu0 0.0
      %378 = vmatpush1.msra.mxu0 0.0
      %379 = vmatprep.subr.mxu0 0.0
      %380 = vmatpush1.msra.mxu0 0.0
      %381 = vmatprep.subr.mxu0 0.0
      %382 = vmatpush1.msra.mxu0 0.0
      %383 = vmatprep.subr.mxu0 0.0
      %384 = vmatpush1.msra.mxu0 0.0
      %385 = vmatprep.subr.mxu0 0.0
      %386 = vmatpush1.msra.mxu0 0.0
      %387 = vmatprep.subr.mxu0 0.0
      %388 = vmatpush1.msra.mxu0 0.0
      %389 = vmatprep.subr.mxu0 0.0
      %390 = vmatpush1.msra.mxu0 0.0
      %391 = vmatprep.subr.mxu0 0.0
      %392 = vmatpush1.msra.mxu0 0.0
      %393 = vmatprep.subr.mxu0 0.0
      %394 = vmatpush1.msra.mxu0 0.0
      %395 = vmatprep.subr.mxu0 0.0
      %396 = vmatpush1.msra.mxu0 0.0
      %397 = vmatprep.subr.mxu0 0.0
      %398 = vmatpush1.msra.mxu0 0.0
      %399 = vmatprep.subr.mxu0 0.0
      %400 = vmatpush1.msra.mxu0 0.0
      %401 = vmatprep.subr.mxu0 0.0
      %402 = vmatpush1.msra.mxu0 0.0
      %403 = vmatprep.subr.mxu0 0.0
      %404 = vmatpush1.msra.mxu0 0.0
      %405 = vmatprep.subr.mxu0 0.0
      %406 = vmatpush1.msra.mxu0 0.0
      %407 = vmatprep.subr.mxu0 0.0
      %408 = vmatpush1.msra.mxu0 0.0
      %409 = vmatprep.subr.mxu0 0.0
      %410 = vmatpush1.msra.mxu0 0.0
      %411 = vmatprep.subr.mxu0 0.0
      %412 = vmatpush1.msra.mxu0 0.0
      %413 = vmatprep.subr.mxu0 0.0
      %414 = vmatpush1.msra.mxu0 0.0
      %415 = vmatprep.subr.mxu0 0.0
      %416 = vmatpush1.msra.mxu0 0.0
      %417 = vmatprep.subr.mxu0 0.0
      %418 = vmatpush1.msra.mxu0 0.0
      %419 = vmatprep.subr.mxu0 0.0
      %420 = vmatpush1.msra.mxu0 0.0
      %421 = vmatprep.subr.mxu0 0.0
      %422 = vmatpush1.msra.mxu0 0.0
      %423 = vmatprep.subr.mxu0 0.0
      %424 = vmatpush1.msra.mxu0 0.0
      %425 = vmatprep.subr.mxu0 0.0
      %426 = vmatpush1.msra.mxu0 0.0
      %427 = vmatprep.subr.mxu0 0.0
      %428 = vmatpush1.msra.mxu0 0.0
      %429 = vmatprep.subr.mxu0 0.0
      %430 = vmatpush1.msra.mxu0 0.0
      %431 = vmatprep.subr.mxu0 0.0
      %432 = vmatpush1.msra.mxu0 0.0
      %433 = vmatprep.subr.mxu0 0.0
      %434 = vmatpush1.msra.mxu0 0.0
      %435 = vmatprep.mubr.f32.mxu0 0.0
      %v436 = vand.u32 %v215, 4294901760
      %v437 = vsub.f32 %v215, %v436
      %438 = vmatmul.mubr.f32.gmra.mrb[0].mxu0 %v437
      %v439 = vpop.f32.mrb[0].mxu0
      %v440 = vadd.f32 %v366, %v439
      %v441 = vpop.f32.mrb[0].mxu0
      %442 = vdwg.mxu0
      %443 = vmatprep.subr.mxu0 0.0
      %v444 = vand.u32 %v212, 4294901760
      %445 = vmatpush1.msra.mxu0 %v444
      %446 = vmatprep.subr.mxu0 0.0
      %447 = vmatpush1.msra.mxu0 0.0
      %448 = vmatprep.subr.mxu0 0.0
      %449 = vmatpush1.msra.mxu0 0.0
      %450 = vmatprep.subr.mxu0 0.0
      %451 = vmatpush1.msra.mxu0 0.0
      %452 = vmatprep.subr.mxu0 0.0
      %453 = vmatpush1.msra.mxu0 0.0
      %454 = vmatprep.subr.mxu0 0.0
      %455 = vmatpush1.msra.mxu0 0.0
      %456 = vmatprep.subr.mxu0 0.0
      %457 = vmatpush1.msra.mxu0 0.0
      %458 = vmatprep.subr.mxu0 0.0
      %459 = vmatpush1.msra.mxu0 0.0
      %460 = vmatprep.subr.mxu0 0.0
      %461 = vmatpush1.msra.mxu0 0.0
      %462 = vmatprep.subr.mxu0 0.0
      %463 = vmatpush1.msra.mxu0 0.0
      %464 = vmatprep.subr.mxu0 0.0
      %465 = vmatpush1.msra.mxu0 0.0
      %466 = vmatprep.subr.mxu0 0.0
      %467 = vmatpush1.msra.mxu0 0.0
      %468 = vmatprep.subr.mxu0 0.0
      %469 = vmatpush1.msra.mxu0 0.0
      %470 = vmatprep.subr.mxu0 0.0
      %471 = vmatpush1.msra.mxu0 0.0
      %472 = vmatprep.subr.mxu0 0.0
      %473 = vmatpush1.msra.mxu0 0.0
      %474 = vmatprep.subr.mxu0 0.0
      %475 = vmatpush1.msra.mxu0 0.0
      %476 = vmatprep.subr.mxu0 0.0
      %477 = vmatpush1.msra.mxu0 0.0
      %478 = vmatprep.subr.mxu0 0.0
      %479 = vmatpush1.msra.mxu0 0.0
      %480 = vmatprep.subr.mxu0 0.0
      %481 = vmatpush1.msra.mxu0 0.0
      %482 = vmatprep.subr.mxu0 0.0
      %483 = vmatpush1.msra.mxu0 0.0
      %484 = vmatprep.subr.mxu0 0.0
      %485 = vmatpush1.msra.mxu0 0.0
      %486 = vmatprep.subr.mxu0 0.0
      %487 = vmatpush1.msra.mxu0 0.0
      %488 = vmatprep.subr.mxu0 0.0
      %489 = vmatpush1.msra.mxu0 0.0
      %490 = vmatprep.subr.mxu0 0.0
      %491 = vmatpush1.msra.mxu0 0.0
      %492 = vmatprep.subr.mxu0 0.0
      %493 = vmatpush1.msra.mxu0 0.0
      %494 = vmatprep.subr.mxu0 0.0
      %495 = vmatpush1.msra.mxu0 0.0
      %496 = vmatprep.subr.mxu0 0.0
      %497 = vmatpush1.msra.mxu0 0.0
      %498 = vmatprep.subr.mxu0 0.0
      %499 = vmatpush1.msra.mxu0 0.0
      %500 = vmatprep.subr.mxu0 0.0
      %501 = vmatpush1.msra.mxu0 0.0
      %502 = vmatprep.subr.mxu0 0.0
      %503 = vmatpush1.msra.mxu0 0.0
      %504 = vmatprep.subr.mxu0 0.0
      %505 = vmatpush1.msra.mxu0 0.0
      %506 = vmatprep.subr.mxu0 0.0
      %507 = vmatpush1.msra.mxu0 0.0
      %508 = vmatprep.mubr.f32.mxu0 0.0
      %v509 = vand.u32 %v215, 4294901760
      %v510 = vsub.f32 %v215, %v509
      %v511 = vand.u32 %v510, 4294901760
      %512 = vmatmul.mubr.f32.gmra.mrb[0].mxu0 %v511
      %v513 = vpop.f32.mrb[0].mxu0
      %v514 = vadd.f32 %v440, %v513
      %v515 = vpop.f32.mrb[0].mxu0
      %516 = vdwg.mxu0
      %517 = vmatprep.subr.mxu0 0.0
      %v518 = vand.u32 %v212, 4294901760
      %v519 = vsub.f32 %v212, %v518
      %v520 = vand.u32 %v519, 4294901760
      %521 = vmatpush1.msra.mxu0 %v520
      %522 = vmatprep.subr.mxu0 0.0
      %523 = vmatpush1.msra.mxu0 0.0
      %524 = vmatprep.subr.mxu0 0.0
      %525 = vmatpush1.msra.mxu0 0.0
      %526 = vmatprep.subr.mxu0 0.0
      %527 = vmatpush1.msra.mxu0 0.0
      %528 = vmatprep.subr.mxu0 0.0
      %529 = vmatpush1.msra.mxu0 0.0
      %530 = vmatprep.subr.mxu0 0.0
      %531 = vmatpush1.msra.mxu0 0.0
      %532 = vmatprep.subr.mxu0 0.0
      %533 = vmatpush1.msra.mxu0 0.0
      %534 = vmatprep.subr.mxu0 0.0
      %535 = vmatpush1.msra.mxu0 0.0
      %536 = vmatprep.subr.mxu0 0.0
      %537 = vmatpush1.msra.mxu0 0.0
      %538 = vmatprep.subr.mxu0 0.0
      %539 = vmatpush1.msra.mxu0 0.0
      %540 = vmatprep.subr.mxu0 0.0
      %541 = vmatpush1.msra.mxu0 0.0
      %542 = vmatprep.subr.mxu0 0.0
      %543 = vmatpush1.msra.mxu0 0.0
      %544 = vmatprep.subr.mxu0 0.0
      %545 = vmatpush1.msra.mxu0 0.0
      %546 = vmatprep.subr.mxu0 0.0
      %547 = vmatpush1.msra.mxu0 0.0
      %548 = vmatprep.subr.mxu0 0.0
      %549 = vmatpush1.msra.mxu0 0.0
      %550 = vmatprep.subr.mxu0 0.0
      %551 = vmatpush1.msra.mxu0 0.0
      %552 = vmatprep.subr.mxu0 0.0
      %553 = vmatpush1.msra.mxu0 0.0
      %554 = vmatprep.subr.mxu0 0.0
      %555 = vmatpush1.msra.mxu0 0.0
      %556 = vmatprep.subr.mxu0 0.0
      %557 = vmatpush1.msra.mxu0 0.0
      %558 = vmatprep.subr.mxu0 0.0
      %559 = vmatpush1.msra.mxu0 0.0
      %560 = vmatprep.subr.mxu0 0.0
      %561 = vmatpush1.msra.mxu0 0.0
      %562 = vmatprep.subr.mxu0 0.0
      %563 = vmatpush1.msra.mxu0 0.0
      %564 = vmatprep.subr.mxu0 0.0
      %565 = vmatpush1.msra.mxu0 0.0
      %566 = vmatprep.subr.mxu0 0.0
      %567 = vmatpush1.msra.mxu0 0.0
      %568 = vmatprep.subr.mxu0 0.0
      %569 = vmatpush1.msra.mxu0 0.0
      %570 = vmatprep.subr.mxu0 0.0
      %571 = vmatpush1.msra.mxu0 0.0
      %572 = vmatprep.subr.mxu0 0.0
      %573 = vmatpush1.msra.mxu0 0.0
      %574 = vmatprep.subr.mxu0 0.0
      %575 = vmatpush1.msra.mxu0 0.0
      %576 = vmatprep.subr.mxu0 0.0
      %577 = vmatpush1.msra.mxu0 0.0
      %578 = vmatprep.subr.mxu0 0.0
      %579 = vmatpush1.msra.mxu0 0.0
      %580 = vmatprep.subr.mxu0 0.0
      %581 = vmatpush1.msra.mxu0 0.0
      %582 = vmatprep.subr.mxu0 0.0
      %583 = vmatpush1.msra.mxu0 0.0
      %584 = vmatprep.mubr.f32.mxu0 0.0
      %v585 = vand.u32 %v215, 4294901760
      %586 = vmatmul.mubr.f32.gmra.mrb[0].mxu0 %v585
      %v587 = vpop.f32.mrb[0].mxu0
      %v588 = vadd.f32 %v514, %v587
      %v589 = vpop.f32.mrb[0].mxu0
      %590 = vdwg.mxu0
      %591 = vmatprep.subr.mxu0 0.0
      %v592 = vand.u32 %v212, 4294901760
      %593 = vmatpush1.msra.mxu0 %v592
      %594 = vmatprep.subr.mxu0 0.0
      %595 = vmatpush1.msra.mxu0 0.0
      %596 = vmatprep.subr.mxu0 0.0
      %597 = vmatpush1.msra.mxu0 0.0
      %598 = vmatprep.subr.mxu0 0.0
      %599 = vmatpush1.msra.mxu0 0.0
      %600 = vmatprep.subr.mxu0 0.0
      %601 = vmatpush1.msra.mxu0 0.0
      %602 = vmatprep.subr.mxu0 0.0
      %603 = vmatpush1.msra.mxu0 0.0
      %604 = vmatprep.subr.mxu0 0.0
      %605 = vmatpush1.msra.mxu0 0.0
      %606 = vmatprep.subr.mxu0 0.0
      %607 = vmatpush1.msra.mxu0 0.0
      %608 = vmatprep.subr.mxu0 0.0
      %609 = vmatpush1.msra.mxu0 0.0
      %610 = vmatprep.subr.mxu0 0.0
      %611 = vmatpush1.msra.mxu0 0.0
      %612 = vmatprep.subr.mxu0 0.0
      %613 = vmatpush1.msra.mxu0 0.0
      %614 = vmatprep.subr.mxu0 0.0
      %615 = vmatpush1.msra.mxu0 0.0
      %616 = vmatprep.subr.mxu0 0.0
      %617 = vmatpush1.msra.mxu0 0.0
      %618 = vmatprep.subr.mxu0 0.0
      %619 = vmatpush1.msra.mxu0 0.0
      %620 = vmatprep.subr.mxu0 0.0
      %621 = vmatpush1.msra.mxu0 0.0
      %622 = vmatprep.subr.mxu0 0.0
      %623 = vmatpush1.msra.mxu0 0.0
      %624 = vmatprep.subr.mxu0 0.0
      %625 = vmatpush1.msra.mxu0 0.0
      %626 = vmatprep.subr.mxu0 0.0
      %627 = vmatpush1.msra.mxu0 0.0
      %628 = vmatprep.subr.mxu0 0.0
      %629 = vmatpush1.msra.mxu0 0.0
      %630 = vmatprep.subr.mxu0 0.0
      %631 = vmatpush1.msra.mxu0 0.0
      %632 = vmatprep.subr.mxu0 0.0
      %633 = vmatpush1.msra.mxu0 0.0
      %634 = vmatprep.subr.mxu0 0.0
      %635 = vmatpush1.msra.mxu0 0.0
      %636 = vmatprep.subr.mxu0 0.0
      %637 = vmatpush1.msra.mxu0 0.0
      %638 = vmatprep.subr.mxu0 0.0
      %639 = vmatpush1.msra.mxu0 0.0
      %640 = vmatprep.subr.mxu0 0.0
      %641 = vmatpush1.msra.mxu0 0.0
      %642 = vmatprep.subr.mxu0 0.0
      %643 = vmatpush1.msra.mxu0 0.0
      %644 = vmatprep.subr.mxu0 0.0
      %645 = vmatpush1.msra.mxu0 0.0
      %646 = vmatprep.subr.mxu0 0.0
      %647 = vmatpush1.msra.mxu0 0.0
      %648 = vmatprep.subr.mxu0 0.0
      %649 = vmatpush1.msra.mxu0 0.0
      %650 = vmatprep.subr.mxu0 0.0
      %651 = vmatpush1.msra.mxu0 0.0
      %652 = vmatprep.subr.mxu0 0.0
      %653 = vmatpush1.msra.mxu0 0.0
      %654 = vmatprep.subr.mxu0 0.0
      %655 = vmatpush1.msra.mxu0 0.0
      %656 = vmatprep.mubr.f32.mxu0 0.0
      %v657 = vand.u32 %v215, 4294901760
      %658 = vmatmul.mubr.f32.gmra.mrb[0].mxu0 %v657
      %v659 = vpop.f32.mrb[0].mxu0
      %v660 = vadd.f32 %v588, %v659
      %v661 = vpop.f32.mrb[0].mxu0
      %662 = vdwg.mxu0
      %v663 = vmul.f32 %v210, %v660
      %v664 = vld [vmem:[%s3] sm:$0xff]
      %v665 = vld [vmem:[%s3 + $0x8] sm:$0xff]
      %v666 = vld [vmem:[%s3 + $0x10] sm:$0xff]
      %v667 = vld [vmem:[%s3 + $0x18] sm:$0xff]
      %vm668 = vcmask 261120
      %v670 = vsel %vm668, %v663, 0
      %672 = vmatprep.subr.mxu0 0.0
      %v673 = vand.u32 %v664, 4294901760
      %674 = vmatpush1.msra.mxu0 %v673
      %675 = vmatprep.subr.mxu0 0.0
      %v676 = vand.u32 %v665, 4294901760
      %677 = vmatpush1.msra.mxu0 %v676
      %678 = vmatprep.subr.mxu0 0.0
      %v679 = vand.u32 %v666, 4294901760
      %680 = vmatpush1.msra.mxu0 %v679
      %681 = vmatprep.subr.mxu0 0.0
      %v682 = vand.u32 %v667, 4294901760
      %683 = vmatpush1.msra.mxu0 %v682
      %684 = vmatprep.subr.mxu0 0.0
      %685 = vmatpush1.msra.mxu0 0.0
      %686 = vmatprep.subr.mxu0 0.0
      %687 = vmatpush1.msra.mxu0 0.0
      %688 = vmatprep.subr.mxu0 0.0
      %689 = vmatpush1.msra.mxu0 0.0
      %690 = vmatprep.subr.mxu0 0.0
      %691 = vmatpush1.msra.mxu0 0.0
      %692 = vmatprep.subr.mxu0 0.0
      %693 = vmatpush1.msra.mxu0 0.0
      %694 = vmatprep.subr.mxu0 0.0
      %695 = vmatpush1.msra.mxu0 0.0
      %696 = vmatprep.subr.mxu0 0.0
      %697 = vmatpush1.msra.mxu0 0.0
      %698 = vmatprep.subr.mxu0 0.0
      %699 = vmatpush1.msra.mxu0 0.0
      %700 = vmatprep.subr.mxu0 0.0
      %701 = vmatpush1.msra.mxu0 0.0
      %702 = vmatprep.subr.mxu0 0.0
      %703 = vmatpush1.msra.mxu0 0.0
      %704 = vmatprep.subr.mxu0 0.0
      %705 = vmatpush1.msra.mxu0 0.0
      %706 = vmatprep.subr.mxu0 0.0
      %707 = vmatpush1.msra.mxu0 0.0
      %708 = vmatprep.subr.mxu0 0.0
      %709 = vmatpush1.msra.mxu0 0.0
      %710 = vmatprep.subr.mxu0 0.0
      %711 = vmatpush1.msra.mxu0 0.0
      %712 = vmatprep.subr.mxu0 0.0
      %713 = vmatpush1.msra.mxu0 0.0
      %714 = vmatprep.subr.mxu0 0.0
      %715 = vmatpush1.msra.mxu0 0.0
      %716 = vmatprep.subr.mxu0 0.0
      %717 = vmatpush1.msra.mxu0 0.0
      %718 = vmatprep.subr.mxu0 0.0
      %719 = vmatpush1.msra.mxu0 0.0
      %720 = vmatprep.subr.mxu0 0.0
      %721 = vmatpush1.msra.mxu0 0.0
      %722 = vmatprep.subr.mxu0 0.0
      %723 = vmatpush1.msra.mxu0 0.0
      %724 = vmatprep.subr.mxu0 0.0
      %725 = vmatpush1.msra.mxu0 0.0
      %726 = vmatprep.subr.mxu0 0.0
      %727 = vmatpush1.msra.mxu0 0.0
      %728 = vmatprep.subr.mxu0 0.0
      %729 = vmatpush1.msra.mxu0 0.0
      %730 = vmatprep.subr.mxu0 0.0
      %731 = vmatpush1.msra.mxu0 0.0
      %732 = vmatprep.subr.mxu0 0.0
      %733 = vmatpush1.msra.mxu0 0.0
      %734 = vmatprep.subr.mxu0 0.0
      %735 = vmatpush1.msra.mxu0 0.0
      %736 = vmatprep.subr.mxu0 0.0
      %737 = vmatpush1.msra.mxu0 0.0
      %738 = vmatprep.subr.mxu0 0.0
      %739 = vmatpush1.msra.mxu0 0.0
      %740 = vmatprep.mubr.f32.mxu0 0.0
      %v741 = vand.u32 %v670, 4294901760
      %v742 = vsub.f32 %v670, %v741
      %v743 = vand.u32 %v742, 4294901760
      %v744 = vsub.f32 %v742, %v743
      %v745 = vand.u32 %v744, 4294901760
      %746 = vmatmul.mubr.f32.gmra.mrb[0].mxu0 %v745
      %v747 = vpop.f32.mrb[0].mxu0
      %v748 = vadd.f32 0.0, %v747
      %v749 = vpop.f32.mrb[0].mxu0
      %750 = vdwg.mxu0
      %751 = vmatprep.subr.mxu0 0.0
      %v752 = vand.u32 %v664, 4294901760
      %v753 = vsub.f32 %v664, %v752
      %v754 = vand.u32 %v753, 4294901760
      %v755 = vsub.f32 %v753, %v754
      %v756 = vand.u32 %v755, 4294901760
      %757 = vmatpush1.msra.mxu0 %v756
      %758 = vmatprep.subr.mxu0 0.0
      %v759 = vand.u32 %v665, 4294901760
      %v760 = vsub.f32 %v665, %v759
      %v761 = vand.u32 %v760, 4294901760
      %v762 = vsub.f32 %v760, %v761
      %v763 = vand.u32 %v762, 4294901760
      %764 = vmatpush1.msra.mxu0 %v763
      %765 = vmatprep.subr.mxu0 0.0
      %v766 = vand.u32 %v666, 4294901760
      %v767 = vsub.f32 %v666, %v766
      %v768 = vand.u32 %v767, 4294901760
      %v769 = vsub.f32 %v767, %v768
      %v770 = vand.u32 %v769, 4294901760
      %771 = vmatpush1.msra.mxu0 %v770
      %772 = vmatprep.subr.mxu0 0.0
      %v773 = vand.u32 %v667, 4294901760
      %v774 = vsub.f32 %v667, %v773
      %v775 = vand.u32 %v774, 4294901760
      %v776 = vsub.f32 %v774, %v775
      %v777 = vand.u32 %v776, 4294901760
      %778 = vmatpush1.msra.mxu0 %v777
      %779 = vmatprep.subr.mxu0 0.0
      %780 = vmatpush1.msra.mxu0 0.0
      %781 = vmatprep.subr.mxu0 0.0
      %782 = vmatpush1.msra.mxu0 0.0
      %783 = vmatprep.subr.mxu0 0.0
      %784 = vmatpush1.msra.mxu0 0.0
      %785 = vmatprep.subr.mxu0 0.0
      %786 = vmatpush1.msra.mxu0 0.0
      %787 = vmatprep.subr.mxu0 0.0
      %788 = vmatpush1.msra.mxu0 0.0
      %789 = vmatprep.subr.mxu0 0.0
      %790 = vmatpush1.msra.mxu0 0.0
      %791 = vmatprep.subr.mxu0 0.0
      %792 = vmatpush1.msra.mxu0 0.0
      %793 = vmatprep.subr.mxu0 0.0
      %794 = vmatpush1.msra.mxu0 0.0
      %795 = vmatprep.subr.mxu0 0.0
      %796 = vmatpush1.msra.mxu0 0.0
      %797 = vmatprep.subr.mxu0 0.0
      %798 = vmatpush1.msra.mxu0 0.0
      %799 = vmatprep.subr.mxu0 0.0
      %800 = vmatpush1.msra.mxu0 0.0
      %801 = vmatprep.subr.mxu0 0.0
      %802 = vmatpush1.msra.mxu0 0.0
      %803 = vmatprep.subr.mxu0 0.0
      %804 = vmatpush1.msra.mxu0 0.0
      %805 = vmatprep.subr.mxu0 0.0
      %806 = vmatpush1.msra.mxu0 0.0
      %807 = vmatprep.subr.mxu0 0.0
      %808 = vmatpush1.msra.mxu0 0.0
      %809 = vmatprep.subr.mxu0 0.0
      %810 = vmatpush1.msra.mxu0 0.0
      %811 = vmatprep.subr.mxu0 0.0
      %812 = vmatpush1.msra.mxu0 0.0
      %813 = vmatprep.subr.mxu0 0.0
      %814 = vmatpush1.msra.mxu0 0.0
      %815 = vmatprep.subr.mxu0 0.0
      %816 = vmatpush1.msra.mxu0 0.0
      %817 = vmatprep.subr.mxu0 0.0
      %818 = vmatpush1.msra.mxu0 0.0
      %819 = vmatprep.subr.mxu0 0.0
      %820 = vmatpush1.msra.mxu0 0.0
      %821 = vmatprep.subr.mxu0 0.0
      %822 = vmatpush1.msra.mxu0 0.0
      %823 = vmatprep.subr.mxu0 0.0
      %824 = vmatpush1.msra.mxu0 0.0
      %825 = vmatprep.subr.mxu0 0.0
      %826 = vmatpush1.msra.mxu0 0.0
      %827 = vmatprep.subr.mxu0 0.0
      %828 = vmatpush1.msra.mxu0 0.0
      %829 = vmatprep.subr.mxu0 0.0
      %830 = vmatpush1.msra.mxu0 0.0
      %831 = vmatprep.subr.mxu0 0.0
      %832 = vmatpush1.msra.mxu0 0.0
      %833 = vmatprep.subr.mxu0 0.0
      %834 = vmatpush1.msra.mxu0 0.0
      %835 = vmatprep.mubr.f32.mxu0 0.0
      %v836 = vand.u32 %v670, 4294901760
      %837 = vmatmul.mubr.f32.gmra.mrb[0].mxu0 %v836
      %v838 = vpop.f32.mrb[0].mxu0
      %v839 = vadd.f32 %v748, %v838
      %v840 = vpop.f32.mrb[0].mxu0
      %841 = vdwg.mxu0
      %842 = vmatprep.subr.mxu0 0.0
      %v843 = vand.u32 %v664, 4294901760
      %v844 = vsub.f32 %v664, %v843
      %845 = vmatpush1.msra.mxu0 %v844
      %846 = vmatprep.subr.mxu0 0.0
      %v847 = vand.u32 %v665, 4294901760
      %v848 = vsub.f32 %v665, %v847
      %849 = vmatpush1.msra.mxu0 %v848
      %850 = vmatprep.subr.mxu0 0.0
      %v851 = vand.u32 %v666, 4294901760
      %v852 = vsub.f32 %v666, %v851
      %853 = vmatpush1.msra.mxu0 %v852
      %854 = vmatprep.subr.mxu0 0.0
      %v855 = vand.u32 %v667, 4294901760
      %v856 = vsub.f32 %v667, %v855
      %857 = vmatpush1.msra.mxu0 %v856
      %858 = vmatprep.subr.mxu0 0.0
      %859 = vmatpush1.msra.mxu0 0.0
      %860 = vmatprep.subr.mxu0 0.0
      %861 = vmatpush1.msra.mxu0 0.0
      %862 = vmatprep.subr.mxu0 0.0
      %863 = vmatpush1.msra.mxu0 0.0
      %864 = vmatprep.subr.mxu0 0.0
      %865 = vmatpush1.msra.mxu0 0.0
      %866 = vmatprep.subr.mxu0 0.0
      %867 = vmatpush1.msra.mxu0 0.0
      %868 = vmatprep.subr.mxu0 0.0
      %869 = vmatpush1.msra.mxu0 0.0
      %870 = vmatprep.subr.mxu0 0.0
      %871 = vmatpush1.msra.mxu0 0.0
      %872 = vmatprep.subr.mxu0 0.0
      %873 = vmatpush1.msra.mxu0 0.0
      %874 = vmatprep.subr.mxu0 0.0
      %875 = vmatpush1.msra.mxu0 0.0
      %876 = vmatprep.subr.mxu0 0.0
      %877 = vmatpush1.msra.mxu0 0.0
      %878 = vmatprep.subr.mxu0 0.0
      %879 = vmatpush1.msra.mxu0 0.0
      %880 = vmatprep.subr.mxu0 0.0
      %881 = vmatpush1.msra.mxu0 0.0
      %882 = vmatprep.subr.mxu0 0.0
      %883 = vmatpush1.msra.mxu0 0.0
      %884 = vmatprep.subr.mxu0 0.0
      %885 = vmatpush1.msra.mxu0 0.0
      %886 = vmatprep.subr.mxu0 0.0
      %887 = vmatpush1.msra.mxu0 0.0
      %888 = vmatprep.subr.mxu0 0.0
      %889 = vmatpush1.msra.mxu0 0.0
      %890 = vmatprep.subr.mxu0 0.0
      %891 = vmatpush1.msra.mxu0 0.0
      %892 = vmatprep.subr.mxu0 0.0
      %893 = vmatpush1.msra.mxu0 0.0
      %894 = vmatprep.subr.mxu0 0.0
      %895 = vmatpush1.msra.mxu0 0.0
      %896 = vmatprep.subr.mxu0 0.0
      %897 = vmatpush1.msra.mxu0 0.0
      %898 = vmatprep.subr.mxu0 0.0
      %899 = vmatpush1.msra.mxu0 0.0
      %900 = vmatprep.subr.mxu0 0.0
      %901 = vmatpush1.msra.mxu0 0.0
      %902 = vmatprep.subr.mxu0 0.0
      %903 = vmatpush1.msra.mxu0 0.0
      %904 = vmatprep.subr.mxu0 0.0
      %905 = vmatpush1.msra.mxu0 0.0
      %906 = vmatprep.subr.mxu0 0.0
      %907 = vmatpush1.msra.mxu0 0.0
      %908 = vmatprep.subr.mxu0 0.0
      %909 = vmatpush1.msra.mxu0 0.0
      %910 = vmatprep.subr.mxu0 0.0
      %911 = vmatpush1.msra.mxu0 0.0
      %912 = vmatprep.subr.mxu0 0.0
      %913 = vmatpush1.msra.mxu0 0.0
      %914 = vmatprep.mubr.f32.mxu0 0.0
      %v915 = vand.u32 %v670, 4294901760
      %v916 = vsub.f32 %v670, %v915
      %917 = vmatmul.mubr.f32.gmra.mrb[0].mxu0 %v916
      %v918 = vpop.f32.mrb[0].mxu0
      %v919 = vadd.f32 %v839, %v918
      %v920 = vpop.f32.mrb[0].mxu0
      %921 = vdwg.mxu0
      %922 = vmatprep.subr.mxu0 0.0
      %v923 = vand.u32 %v664, 4294901760
      %924 = vmatpush1.msra.mxu0 %v923
      %925 = vmatprep.subr.mxu0 0.0
      %v926 = vand.u32 %v665, 4294901760
      %927 = vmatpush1.msra.mxu0 %v926
      %928 = vmatprep.subr.mxu0 0.0
      %v929 = vand.u32 %v666, 4294901760
      %930 = vmatpush1.msra.mxu0 %v929
      %931 = vmatprep.subr.mxu0 0.0
      %v932 = vand.u32 %v667, 4294901760
      %933 = vmatpush1.msra.mxu0 %v932
      %934 = vmatprep.subr.mxu0 0.0
      %935 = vmatpush1.msra.mxu0 0.0
      %936 = vmatprep.subr.mxu0 0.0
      %937 = vmatpush1.msra.mxu0 0.0
      %938 = vmatprep.subr.mxu0 0.0
      %939 = vmatpush1.msra.mxu0 0.0
      %940 = vmatprep.subr.mxu0 0.0
      %941 = vmatpush1.msra.mxu0 0.0
      %942 = vmatprep.subr.mxu0 0.0
      %943 = vmatpush1.msra.mxu0 0.0
      %944 = vmatprep.subr.mxu0 0.0
      %945 = vmatpush1.msra.mxu0 0.0
      %946 = vmatprep.subr.mxu0 0.0
      %947 = vmatpush1.msra.mxu0 0.0
      %948 = vmatprep.subr.mxu0 0.0
      %949 = vmatpush1.msra.mxu0 0.0
      %950 = vmatprep.subr.mxu0 0.0
      %951 = vmatpush1.msra.mxu0 0.0
      %952 = vmatprep.subr.mxu0 0.0
      %953 = vmatpush1.msra.mxu0 0.0
      %954 = vmatprep.subr.mxu0 0.0
      %955 = vmatpush1.msra.mxu0 0.0
      %956 = vmatprep.subr.mxu0 0.0
      %957 = vmatpush1.msra.mxu0 0.0
      %958 = vmatprep.subr.mxu0 0.0
      %959 = vmatpush1.msra.mxu0 0.0
      %960 = vmatprep.subr.mxu0 0.0
      %961 = vmatpush1.msra.mxu0 0.0
      %962 = vmatprep.subr.mxu0 0.0
      %963 = vmatpush1.msra.mxu0 0.0
      %964 = vmatprep.subr.mxu0 0.0
      %965 = vmatpush1.msra.mxu0 0.0
      %966 = vmatprep.subr.mxu0 0.0
      %967 = vmatpush1.msra.mxu0 0.0
      %968 = vmatprep.subr.mxu0 0.0
      %969 = vmatpush1.msra.mxu0 0.0
      %970 = vmatprep.subr.mxu0 0.0
      %971 = vmatpush1.msra.mxu0 0.0
      %972 = vmatprep.subr.mxu0 0.0
      %973 = vmatpush1.msra.mxu0 0.0
      %974 = vmatprep.subr.mxu0 0.0
      %975 = vmatpush1.msra.mxu0 0.0
      %976 = vmatprep.subr.mxu0 0.0
      %977 = vmatpush1.msra.mxu0 0.0
      %978 = vmatprep.subr.mxu0 0.0
      %979 = vmatpush1.msra.mxu0 0.0
      %980 = vmatprep.subr.mxu0 0.0
      %981 = vmatpush1.msra.mxu0 0.0
      %982 = vmatprep.subr.mxu0 0.0
      %983 = vmatpush1.msra.mxu0 0.0
      %984 = vmatprep.subr.mxu0 0.0
      %985 = vmatpush1.msra.mxu0 0.0
      %986 = vmatprep.subr.mxu0 0.0
      %987 = vmatpush1.msra.mxu0 0.0
      %988 = vmatprep.subr.mxu0 0.0
      %989 = vmatpush1.msra.mxu0 0.0
      %990 = vmatprep.mubr.f32.mxu0 0.0
      %v991 = vand.u32 %v670, 4294901760
      %v992 = vsub.f32 %v670, %v991
      %v993 = vand.u32 %v992, 4294901760
      %994 = vmatmul.mubr.f32.gmra.mrb[0].mxu0 %v993
      %v995 = vpop.f32.mrb[0].mxu0
      %v996 = vadd.f32 %v919, %v995
      %v997 = vpop.f32.mrb[0].mxu0
      %998 = vdwg.mxu0
      %999 = vmatprep.subr.mxu0 0.0
      %v1000 = vand.u32 %v664, 4294901760
      %v1001 = vsub.f32 %v664, %v1000
      %v1002 = vand.u32 %v1001, 4294901760
      %1003 = vmatpush1.msra.mxu0 %v1002
      %1004 = vmatprep.subr.mxu0 0.0
      %v1005 = vand.u32 %v665, 4294901760
      %v1006 = vsub.f32 %v665, %v1005
      %v1007 = vand.u32 %v1006, 4294901760
      %1008 = vmatpush1.msra.mxu0 %v1007
      %1009 = vmatprep.subr.mxu0 0.0
      %v1010 = vand.u32 %v666, 4294901760
      %v1011 = vsub.f32 %v666, %v1010
      %v1012 = vand.u32 %v1011, 4294901760
      %1013 = vmatpush1.msra.mxu0 %v1012
      %1014 = vmatprep.subr.mxu0 0.0
      %v1015 = vand.u32 %v667, 4294901760
      %v1016 = vsub.f32 %v667, %v1015
      %v1017 = vand.u32 %v1016, 4294901760
      %1018 = vmatpush1.msra.mxu0 %v1017
      %1019 = vmatprep.subr.mxu0 0.0
      %1020 = vmatpush1.msra.mxu0 0.0
      %1021 = vmatprep.subr.mxu0 0.0
      %1022 = vmatpush1.msra.mxu0 0.0
      %1023 = vmatprep.subr.mxu0 0.0
      %1024 = vmatpush1.msra.mxu0 0.0
      %1025 = vmatprep.subr.mxu0 0.0
      %1026 = vmatpush1.msra.mxu0 0.0
      %1027 = vmatprep.subr.mxu0 0.0
      %1028 = vmatpush1.msra.mxu0 0.0
      %1029 = vmatprep.subr.mxu0 0.0
      %1030 = vmatpush1.msra.mxu0 0.0
      %1031 = vmatprep.subr.mxu0 0.0
      %1032 = vmatpush1.msra.mxu0 0.0
      %1033 = vmatprep.subr.mxu0 0.0
      %1034 = vmatpush1.msra.mxu0 0.0
      %1035 = vmatprep.subr.mxu0 0.0
      %1036 = vmatpush1.msra.mxu0 0.0
      %1037 = vmatprep.subr.mxu0 0.0
      %1038 = vmatpush1.msra.mxu0 0.0
      %1039 = vmatprep.subr.mxu0 0.0
      %1040 = vmatpush1.msra.mxu0 0.0
      %1041 = vmatprep.subr.mxu0 0.0
      %1042 = vmatpush1.msra.mxu0 0.0
      %1043 = vmatprep.subr.mxu0 0.0
      %1044 = vmatpush1.msra.mxu0 0.0
      %1045 = vmatprep.subr.mxu0 0.0
      %1046 = vmatpush1.msra.mxu0 0.0
      %1047 = vmatprep.subr.mxu0 0.0
      %1048 = vmatpush1.msra.mxu0 0.0
      %1049 = vmatprep.subr.mxu0 0.0
      %1050 = vmatpush1.msra.mxu0 0.0
      %1051 = vmatprep.subr.mxu0 0.0
      %1052 = vmatpush1.msra.mxu0 0.0
      %1053 = vmatprep.subr.mxu0 0.0
      %1054 = vmatpush1.msra.mxu0 0.0
      %1055 = vmatprep.subr.mxu0 0.0
      %1056 = vmatpush1.msra.mxu0 0.0
      %1057 = vmatprep.subr.mxu0 0.0
      %1058 = vmatpush1.msra.mxu0 0.0
      %1059 = vmatprep.subr.mxu0 0.0
      %1060 = vmatpush1.msra.mxu0 0.0
      %1061 = vmatprep.subr.mxu0 0.0
      %1062 = vmatpush1.msra.mxu0 0.0
      %1063 = vmatprep.subr.mxu0 0.0
      %1064 = vmatpush1.msra.mxu0 0.0
      %1065 = vmatprep.subr.mxu0 0.0
      %1066 = vmatpush1.msra.mxu0 0.0
      %1067 = vmatprep.subr.mxu0 0.0
      %1068 = vmatpush1.msra.mxu0 0.0
      %1069 = vmatprep.subr.mxu0 0.0
      %1070 = vmatpush1.msra.mxu0 0.0
      %1071 = vmatprep.subr.mxu0 0.0
      %1072 = vmatpush1.msra.mxu0 0.0
      %1073 = vmatprep.subr.mxu0 0.0
      %1074 = vmatpush1.msra.mxu0 0.0
      %1075 = vmatprep.mubr.f32.mxu0 0.0
      %v1076 = vand.u32 %v670, 4294901760
      %1077 = vmatmul.mubr.f32.gmra.mrb[0].mxu0 %v1076
      %v1078 = vpop.f32.mrb[0].mxu0
      %v1079 = vadd.f32 %v996, %v1078
      %v1080 = vpop.f32.mrb[0].mxu0
      %1081 = vdwg.mxu0
      %1082 = vmatprep.subr.mxu0 0.0
      %v1083 = vand.u32 %v664, 4294901760
      %1084 = vmatpush1.msra.mxu0 %v1083
      %1085 = vmatprep.subr.mxu0 0.0
      %v1086 = vand.u32 %v665, 4294901760
      %1087 = vmatpush1.msra.mxu0 %v1086
      %1088 = vmatprep.subr.mxu0 0.0
      %v1089 = vand.u32 %v666, 4294901760
      %1090 = vmatpush1.msra.mxu0 %v1089
      %1091 = vmatprep.subr.mxu0 0.0
      %v1092 = vand.u32 %v667, 4294901760
      %1093 = vmatpush1.msra.mxu0 %v1092
      %1094 = vmatprep.subr.mxu0 0.0
      %1095 = vmatpush1.msra.mxu0 0.0
      %1096 = vmatprep.subr.mxu0 0.0
      %1097 = vmatpush1.msra.mxu0 0.0
      %1098 = vmatprep.subr.mxu0 0.0
      %1099 = vmatpush1.msra.mxu0 0.0
      %1100 = vmatprep.subr.mxu0 0.0
      %1101 = vmatpush1.msra.mxu0 0.0
      %1102 = vmatprep.subr.mxu0 0.0
      %1103 = vmatpush1.msra.mxu0 0.0
      %1104 = vmatprep.subr.mxu0 0.0
      %1105 = vmatpush1.msra.mxu0 0.0
      %1106 = vmatprep.subr.mxu0 0.0
      %1107 = vmatpush1.msra.mxu0 0.0
      %1108 = vmatprep.subr.mxu0 0.0
      %1109 = vmatpush1.msra.mxu0 0.0
      %1110 = vmatprep.subr.mxu0 0.0
      %1111 = vmatpush1.msra.mxu0 0.0
      %1112 = vmatprep.subr.mxu0 0.0
      %1113 = vmatpush1.msra.mxu0 0.0
      %1114 = vmatprep.subr.mxu0 0.0
      %1115 = vmatpush1.msra.mxu0 0.0
      %1116 = vmatprep.subr.mxu0 0.0
      %1117 = vmatpush1.msra.mxu0 0.0
      %1118 = vmatprep.subr.mxu0 0.0
      %1119 = vmatpush1.msra.mxu0 0.0
      %1120 = vmatprep.subr.mxu0 0.0
      %1121 = vmatpush1.msra.mxu0 0.0
      %1122 = vmatprep.subr.mxu0 0.0
      %1123 = vmatpush1.msra.mxu0 0.0
      %1124 = vmatprep.subr.mxu0 0.0
      %1125 = vmatpush1.msra.mxu0 0.0
      %1126 = vmatprep.subr.mxu0 0.0
      %1127 = vmatpush1.msra.mxu0 0.0
      %1128 = vmatprep.subr.mxu0 0.0
      %1129 = vmatpush1.msra.mxu0 0.0
      %1130 = vmatprep.subr.mxu0 0.0
      %1131 = vmatpush1.msra.mxu0 0.0
      %1132 = vmatprep.subr.mxu0 0.0
      %1133 = vmatpush1.msra.mxu0 0.0
      %1134 = vmatprep.subr.mxu0 0.0
      %1135 = vmatpush1.msra.mxu0 0.0
      %1136 = vmatprep.subr.mxu0 0.0
      %1137 = vmatpush1.msra.mxu0 0.0
      %1138 = vmatprep.subr.mxu0 0.0
      %1139 = vmatpush1.msra.mxu0 0.0
      %1140 = vmatprep.subr.mxu0 0.0
      %1141 = vmatpush1.msra.mxu0 0.0
      %1142 = vmatprep.subr.mxu0 0.0
      %1143 = vmatpush1.msra.mxu0 0.0
      %1144 = vmatprep.subr.mxu0 0.0
      %1145 = vmatpush1.msra.mxu0 0.0
      %1146 = vmatprep.subr.mxu0 0.0
      %1147 = vmatpush1.msra.mxu0 0.0
      %1148 = vmatprep.subr.mxu0 0.0
      %1149 = vmatpush1.msra.mxu0 0.0
      %1150 = vmatprep.mubr.f32.mxu0 0.0
      %v1151 = vand.u32 %v670, 4294901760
      %1152 = vmatmul.mubr.f32.gmra.mrb[0].mxu0 %v1151
      %v1153 = vpop.f32.mrb[0].mxu0
      %v1154 = vadd.f32 %v1079, %v1153
      %v1155 = vpop.f32.mrb[0].mxu0
      %1156 = vdwg.mxu0
      %vm1157 = vcmask 31744
      %1158 = vst.msk [vmem:[%s209] sm:$0xff] %vm1157, %v1154
      %p1159 = scmp.lt.s32.totalorder %s15, 1
      %s1160 = scalar_select %p1159, %s15, 1
      %s1161 = smul.addr %s1160, 8
      %s1162 = scalar_lea.vmem %s4, %s1161
      // Predicated region
      $region37: #{tpu_custom_call.1} parent=35 // pred_check
        %p1163 = pneg %p127
      $region38: #{tpu_custom_call.1} parent=35 // pred_check_branch
        %1165 = sbr.rel (%p1163) target = $region40
      $region39: #{tpu_custom_call.1} parent=35 // pred_region
        _
      $region40: #{tpu_custom_call.1} parent=35 // pred_fallthru
        _
    $region36: #{tpu_custom_call.1} parent=5 // pred_fallthru
      _
    %p1166 = scmp.le.s32.totalorder 2, %s10
    // Predicated region
    $region41: #{tpu_custom_call.1} parent=5 // pred_check
      %p1167 = pneg %p1166
    $region42: #{tpu_custom_call.1} parent=5 // pred_check_branch
      %1169 = sbr.rel (%p1167) target = $region44
    $region43: #{tpu_custom_call.1} parent=5 // pred_region
      %s1170 = ssub.s32 %s10, 2
      // Predicated region
      $region45: #{tpu_custom_call.1} parent=43 // pred_check
        %p1171 = pneg %p133
      $region46: #{tpu_custom_call.1} parent=43 // pred_check_branch
        %1173 = sbr.rel (%p1171) target = $region48
      $region47: #{tpu_custom_call.1} parent=43 // pred_region
        %p1174 = scmp.lt.s32.totalorder %s16, 1
        %s1175 = scalar_select %p1174, %s16, 1
        %s1176 = smul.addr %s1175, 8
        %s1177 = scalar_lea.vmem %s4, %s1176
      $region48: #{tpu_custom_call.1} parent=43 // pred_fallthru
        _
    $region44: #{tpu_custom_call.1} parent=5 // pred_fallthru
      _
  $region6: #{tpu_custom_call.1} parent=0 // loop_footer
    %s14 = sadd.s32 1, %s10
  $region7: #{tpu_custom_call.1} parent=0 // loop_footer_branch
    %9 = sbr.rel target = $region3
  $region8: #{tpu_custom_call.1} parent=0 // loop_exit
    _

</llo_original>
